<compile_context>
chip_gen: v5e
topology: v5e:2x2
jax: 0.10.0
libtpu: 0.0.40
codegen_flags: <defaults>
</compile_context>

<pallas_src>
import jax
import jax.numpy as jnp
from jax.experimental import pallas as pl
from jax.experimental.pallas import tpu as pltpu


# ~4 MiB x-tile budget: past the measured roofline knee (1-4 MiB on v6e) and,
# double-buffered for x+y (~16 MiB), still comfortably under the explicit
# vmem_limit_bytes below on every generation (v5e/v6e: 128 MiB physical,
# v7x: 64 MiB physical per TC).
_TILE_BUDGET_BYTES = 4 * 1024 * 1024
_VMEM_LIMIT_BYTES = 32 * 1024 * 1024


def _scale_mul_kernel(x_ref, g_ref, y_ref):
    # Pure VPU broadcast-multiply: x tile (TB, TC) * resident g slice (1, TC).
    y_ref[...] = (x_ref[...] * g_ref[...]).astype(y_ref.dtype)


def _sublane(itemsize):
    return 8 if itemsize >= 4 else (16 if itemsize == 2 else 32)


def _pick_tiles(rows, cols, itemsize, budget):
    """Pick (row_tile, col_tile): (sublane,128)-aligned, x tile <= budget."""
    sub = _sublane(itemsize)

    # --- column tile: full width if a minimal (sublane, cols) slab fits,
    # otherwise tile the lane axis in 128-multiples (cap 2048 lanes). ---
    if cols <= 128 or cols * itemsize * sub <= budget:
        tc = cols
    else:
        lanes = max(budget // (itemsize * sub), 128)
        tc = min((lanes // 128) * 128, 2048)
        tc = max(min(tc, cols), 128)

    # --- row tile within the remaining budget ---
    max_rows = max(budget // max(tc * itemsize, 1), sub)
    tb = min(rows, max_rows)

    # v7x megacore: if the whole array would be a single grid step but is more
    # than a few MiB, split rows so the "parallel" axis has >= 2 steps and both
    # TensorCores stream from HBM.
    if (tb >= rows and tc >= cols
            and rows * cols * itemsize > (4 << 20)
            and rows >= 2 * sub):
        tb = rows // 2

    if tb < rows:
        tb = max((tb // sub) * sub, sub)
    return int(tb), int(tc)


def _run_pallas(x2, g2, rows, cols, itemsize, block_rows, donate,
                tile_budget):
    tb, tc = _pick_tiles(rows, cols, itemsize, tile_budget)

    # Honor a user row-tile override, but keep it sublane-aligned and within
    # the VMEM budget.  Only applies when the lane axis is 128-aligned (a
    # partial-row block with an irregular last dim would violate (8,128)).
    if block_rows is not None and (cols % 128 == 0):
        sub = _sublane(itemsize)
        cap = max(tile_budget // max(tc * itemsize, 1), sub)
        tb = max(min(int(block_rows), rows, cap), 1)
        if tb < rows:
            tb = max((tb // sub) * sub, sub)

    grid = (pl.cdiv(rows, tb), pl.cdiv(cols, tc))

    kwargs = {}
    if donate:
        # y reuses x's HBM buffer (same shape/dtype by construction).
        kwargs["input_output_aliases"] = {0: 0}

    return pl.pallas_call(
        _scale_mul_kernel,
        out_shape=jax.ShapeDtypeStruct((rows, cols), x2.dtype),
        grid=grid,
        in_specs=[
            pl.BlockSpec((tb, tc), lambda i, j: (i, j)),   # x tile, pipelined
            pl.BlockSpec((1, tc), lambda i, j: (0, j)),    # g resident per col
        ],
        out_specs=pl.BlockSpec((tb, tc), lambda i, j: (i, j)),
        compiler_params=pltpu.CompilerParams(
            dimension_semantics=("parallel", "parallel"),
            vmem_limit_bytes=_VMEM_LIMIT_BYTES,
        ),
        **kwargs,
    )(x2, g2)


def scaling_forward(x, scale, p_log_det=None, reverse=False, block_rows=None,
                    donate_x=False, tile_budget_bytes=None):
    """Pallas implementation of Scaling.forward.

    Args:
      x: (B, dim) array.
      scale: (1, dim) parameter.
      p_log_det: optional scalar prior log-det.
      reverse: static Python bool.
      block_rows: optional row-tile override (rounded to the dtype sublane
        multiple and capped by the VMEM budget).
      donate_x: if True, alias the output onto x's HBM buffer (caller must not
        reuse x afterwards).
      tile_budget_bytes: optional override of the per-tile VMEM budget
        (mainly for testing the 2-D tiling path at small sizes).
    Returns:
      (y, log_det + p_log_det)
    """
    B, D = x.shape
    assert scale.shape == (1, D)
    sign = -1.0 if reverse else 1.0
    budget = _TILE_BUDGET_BYTES if tile_budget_bytes is None else int(
        tile_budget_bytes)

    # Hoisted out of the kernel: tiny (1, D) ops, fused by XLA.
    g = jnp.exp(sign * scale.astype(jnp.float32))          # (1, D) f32
    if jnp.issubdtype(x.dtype, jnp.floating):
        # Keep the multiply in x.dtype: bf16 VALU on v6e/v7x, no-op for f32.
        g = g.astype(x.dtype)
    log_det = jnp.sum(scale.astype(jnp.float32))            # always +scale, f32 acc
    if p_log_det is None:
        p_log_det = 0.0

    itemsize = jnp.dtype(x.dtype).itemsize

    # --- choose a lane-dense 2-D view and dispatch ---
    if D % 128 == 0:
        y = _run_pallas(x, g, B, D, itemsize, block_rows, donate_x, budget)
        return y, log_det + p_log_det

    if 128 % D == 0 and (B * D) % 128 == 0:
        # Re-view (B, D) as (B*D/128, 128); the scale pattern repeats exactly
        # along the 128 lanes since D divides 128.
        rows, cols = (B * D) // 128, 128
        x2 = x.reshape(rows, cols)
        g2 = jnp.tile(g, (1, 128 // D))
        y2 = _run_pallas(x2, g2, rows, cols, itemsize, block_rows, donate_x,
                         budget)
        return y2.reshape(B, D), log_det + p_log_det

    d_main = (D // 128) * 128
    if d_main >= 128:
        # Irregular wide D: lane-dense 128-multiple slab via Pallas (unmasked
        # vst on every tile) + tiny tail handled by XLA.
        y_main = _run_pallas(x[:, :d_main], g[:, :d_main], B, d_main,
                             itemsize, block_rows, False, budget)
        y_tail = (x[:, d_main:] * g[:, d_main:]).astype(x.dtype)
        return jnp.concatenate([y_main, y_tail], axis=1), log_det + p_log_det

    # Tiny irregular shapes: single full block (block dims == array dims).
    y = _run_pallas(x, g, B, D, itemsize, None, donate_x, budget)
    return y, log_det + p_log_det


if __name__ == "__main__":
    key = jax.random.PRNGKey(0)
    kx, ks, kx2, ks2, kx3, ks3 = jax.random.split(key, 6)

    # --- shapes implied by the module: x (B, dim), scale (1, dim) ---
    B, dim = 2, 32
    x = jax.random.normal(kx, (B, dim), dtype=jnp.float32)
    # Module __init__ uses zeros; use small random values so the test is
    # non-trivial, initialized deterministically in-script.
    scale = 0.1 * jax.random.normal(ks, (1, dim), dtype=jnp.float32)

    # forward (tiny irregular-D full-block path)
    y, log_det = scaling_forward(x, scale, p_log_det=None, reverse=False)
    jax.block_until_ready((y, log_det))
    assert jnp.allclose(y, x * jnp.exp(scale), atol=1e-5, rtol=1e-5)
    assert jnp.allclose(log_det, jnp.sum(scale), atol=1e-5, rtol=1e-5)

    # reverse path
    y_r, log_det_r = scaling_forward(x, scale, p_log_det=1.5, reverse=True)
    jax.block_until_ready((y_r, log_det_r))
    assert jnp.allclose(y_r, x * jnp.exp(-scale), atol=1e-5, rtol=1e-5)
    assert jnp.allclose(log_det_r, jnp.sum(scale) + 1.5, atol=1e-5, rtol=1e-5)

    # multi-step pipelined path (lane-aligned D, forced + sublane-rounded rows)
    B2, D2 = 512, 256
    xb = jax.random.normal(kx2, (B2, D2), dtype=jnp.float32)
    sb = 0.05 * jax.random.normal(ks2, (1, D2), dtype=jnp.float32)
    yb, ldb = scaling_forward(xb, sb, reverse=False, block_rows=100)  # → 96
    jax.block_until_ready((yb, ldb))
    assert jnp.allclose(yb, xb * jnp.exp(sb), atol=1e-5, rtol=1e-5)
    assert jnp.allclose(ldb, jnp.sum(sb), atol=1e-5, rtol=1e-5)

    # lane-dense reshape path (D=32, B*D multiple of 128)
    B3, D3 = 8, 32
    xc = jax.random.normal(kx2, (B3, D3), dtype=jnp.float32)
    sc = 0.05 * jax.random.normal(ks2, (1, D3), dtype=jnp.float32)
    yc, ldc = scaling_forward(xc, sc, p_log_det=0.25, reverse=True)
    jax.block_until_ready((yc, ldc))
    assert jnp.allclose(yc, xc * jnp.exp(-sc), atol=1e-5, rtol=1e-5)
    assert jnp.allclose(ldc, jnp.sum(sc) + 0.25, atol=1e-5, rtol=1e-5)

    # 2-D (row + column) tiling path, forced via a tiny tile budget
    B4, D4 = 64, 1024
    xd = jax.random.normal(kx3, (B4, D4), dtype=jnp.float32)
    sd = 0.05 * jax.random.normal(ks3, (1, D4), dtype=jnp.float32)
    yd, ldd = scaling_forward(xd, sd, tile_budget_bytes=16 * 1024)
    jax.block_until_ready((yd, ldd))
    assert jnp.allclose(yd, xd * jnp.exp(sd), atol=1e-5, rtol=1e-5)
    assert jnp.allclose(ldd, jnp.sum(sd), atol=1e-5, rtol=1e-5)

    # irregular wide-D path: lane-dense slab (Pallas) + XLA tail
    B5, D5 = 16, 200
    xe = jax.random.normal(kx3, (B5, D5), dtype=jnp.float32)
    se = 0.05 * jax.random.normal(ks3, (1, D5), dtype=jnp.float32)
    ye, lde = scaling_forward(xe, se, p_log_det=0.5, reverse=True)
    jax.block_until_ready((ye, lde))
    assert jnp.allclose(ye, xe * jnp.exp(-se), atol=1e-5, rtol=1e-5)
    assert jnp.allclose(lde, jnp.sum(se) + 0.5, atol=1e-5, rtol=1e-5)

    # bf16 inputs: g is cast to bf16 so the multiply stays on the bf16 VALU
    B6, D6 = 128, 256
    xf = jax.random.normal(kx2, (B6, D6), dtype=jnp.bfloat16)
    sf = 0.05 * jax.random.normal(ks2, (1, D6), dtype=jnp.float32)
    yf, ldf = scaling_forward(xf, sf, reverse=False)
    jax.block_until_ready((yf, ldf))
    ref = (xf.astype(jnp.float32) * jnp.exp(sf)).astype(jnp.bfloat16)
    assert jnp.allclose(yf.astype(jnp.float32), ref.astype(jnp.float32),
                        atol=2e-2, rtol=2e-2)
    assert jnp.allclose(ldf, jnp.sum(sf), atol=1e-5, rtol=1e-5)

    print("KERNEL_OK")
</pallas_src>

<mosaic_0001>
module attributes {stable_mosaic.version = 11 : i64} {
  func.func @_scale_mul_kernel(%arg0: i32, %arg1: i32, %arg2: memref<2x32xf32, #tpu.memory_space<vmem>>, %arg3: memref<1x32xf32, #tpu.memory_space<vmem>>, %arg4: memref<2x32xf32, #tpu.memory_space<vmem>>) attributes {dimension_semantics = [#tpu.dimension_semantics<parallel>, #tpu.dimension_semantics<parallel>], iteration_bounds = array<i64: 1, 1>, scalar_prefetch = 0 : i64, scratch_operands = 0 : i64, tpu.core_type = #tpu.core_type<tc>, window_params = [{transform_indices = @transform_0, window_bounds = array<i64: 2, 32>}, {transform_indices = @transform_1, window_bounds = array<i64: 1, 32>}, {transform_indices = @transform_2, window_bounds = array<i64: 2, 32>}]} {
    %c0 = arith.constant 0 : index
    %c0_0 = arith.constant 0 : index
    %0 = vector.load %arg2[%c0, %c0_0] : memref<2x32xf32, #tpu.memory_space<vmem>>, vector<2x32xf32>
    %c0_1 = arith.constant 0 : index
    %c0_2 = arith.constant 0 : index
    %1 = vector.load %arg3[%c0_1, %c0_2] : memref<1x32xf32, #tpu.memory_space<vmem>>, vector<1x32xf32>
    %2 = vector.broadcast %1 : vector<1x32xf32> to vector<2x32xf32>
    %3 = arith.mulf %0, %2 : vector<2x32xf32>
    %c0_3 = arith.constant 0 : index
    %c0_4 = arith.constant 0 : index
    %4 = vector.load %arg4[%c0_3, %c0_4] : memref<2x32xf32, #tpu.memory_space<vmem>>, vector<2x32xf32>
    tpu.vector_store %arg4[%c0_3, %c0_4], %3 {strides = array<i32>} : memref<2x32xf32, #tpu.memory_space<vmem>>, vector<2x32xf32>,
    return
  }
  func.func @transform_0(%arg0: i32, %arg1: i32) -> (i32, i32) {
    %c0_i32 = arith.constant 0 : i32
    return %arg0, %arg1 : i32, i32
  }
  func.func @transform_1(%arg0: i32, %arg1: i32) -> (i32, i32) {
    %c0_i32 = arith.constant 0 : i32
    %c0_i32_0 = arith.constant 0 : i32
    return %c0_i32, %arg1 : i32, i32
  }
  func.func @transform_2(%arg0: i32, %arg1: i32) -> (i32, i32) {
    %c0_i32 = arith.constant 0 : i32
    return %arg0, %arg1 : i32, i32
  }
}

</mosaic_0001>

<llo_original>
// kernel: tpu_custom_call.1
$region0: #{tpu_custom_call.1}
  #allocation0 [shape = 'u32[]', space=smem, size = 0x4, offset = 0x4, fixed_abs, tag = 'smem constant byte address 0x4 - core index']
  #allocation1 [shape = 'u32[72,128]{1,0:T(1,128)}', space=vmem, size = 0x9000, scoped, tag = 'internal scratch']
  %s0 = inlined_call_operand.hbm [shape: f32[2,32], index: 0, kind: input, shape index: {}]
  %s1 = inlined_call_operand.hbm [shape: f32[1,32], index: 1, kind: input, shape index: {}]
  %s2 = inlined_call_operand.hbm [shape: f32[2,32], index: 2, kind: output, shape index: {}]
  %s3 = sld [smem:[#allocation0]]
  $region26: #{tpu_custom_call.1} parent=0
    _
  %s5 = ssub.s32 1, %s3
  %s6 = scalar_select 0, %s5, %s3
  $region1: #{tpu_custom_call.1} parent=0
    #allocation2 [shape = 'u8[1024]{0}', space=vmem, size = 0x400, scoped, tag = 'input window, operand 0, single buffered']
    #allocation3 [shape = 's32[1]{0}', space=sflag, size = 0x4, scoped, tag = 'scoped memory for tpu_custom_call.1']
    #allocation4 [shape = 's32[1]{0}', space=sflag, size = 0x4, scoped, tag = 'scoped memory for tpu_custom_call.1']
    #allocation5 [shape = 'u8[512]{0}', space=vmem, size = 0x400, scoped, tag = 'input window, operand 1, single buffered']
    #allocation6 [shape = 's32[1]{0}', space=sflag, size = 0x4, scoped, tag = 'scoped memory for tpu_custom_call.1']
    #allocation7 [shape = 'u8[1024]{0}', space=vmem, size = 0x400, scoped, tag = 'output window, operand 0, single buffered']
    %7 = vsyncpa [#allocation3], 0
    %8 = vsyncpa [#allocation6], 0
    %9 = vsyncpa [#allocation4], 0
    // Predicated region
    $region2: #{tpu_custom_call.1} parent=1 // pred_check
      _
    $region3: #{tpu_custom_call.1} parent=1 // pred_check_branch
      %11 = sbr.rel (0) target = $region5
    $region4: #{tpu_custom_call.1} parent=1 // pred_region
      %13 = vsyncadd [#allocation3], 0
      %s15 = sshll.u32 %s0, 4
      %s16 = int_to_ptr.hbm [resolvable:$true] %s15
      %s17 = sshll.u32 [#allocation2], 4
      %s18 = int_to_ptr.vmem [resolvable:$true] %s17
      %20 = dma.hbm_to_vmem [thread:$0]  %s16, 32, %s18, [#allocation3]
    $region5: #{tpu_custom_call.1} parent=1 // pred_fallthru
      _
    // Predicated region
    $region6: #{tpu_custom_call.1} parent=1 // pred_check
      _
    $region7: #{tpu_custom_call.1} parent=1 // pred_check_branch
      %22 = sbr.rel (0) target = $region9
    $region8: #{tpu_custom_call.1} parent=1 // pred_region
      %24 = vsyncadd [#allocation6], 0
      %s26 = sshll.u32 %s1, 4
      %s27 = int_to_ptr.hbm [resolvable:$true] %s26
      %s28 = sshll.u32 [#allocation5], 4
      %s29 = int_to_ptr.vmem [resolvable:$true] %s28
      %31 = dma.hbm_to_vmem [thread:$0]  %s27, 16, %s29, [#allocation6]
    $region9: #{tpu_custom_call.1} parent=1 // pred_fallthru
      _
    // Predicated region
    $region10: #{tpu_custom_call.1} parent=1 // pred_check
      _
    $region11: #{tpu_custom_call.1} parent=1 // pred_check_branch
      %33 = sbr.rel (0) target = $region13
    $region12: #{tpu_custom_call.1} parent=1 // pred_region
      %35 = dma.done [#allocation3], 32
    $region13: #{tpu_custom_call.1} parent=1 // pred_fallthru
      _
    // Predicated region
    $region14: #{tpu_custom_call.1} parent=1 // pred_check
      _
    $region15: #{tpu_custom_call.1} parent=1 // pred_check_branch
      %37 = sbr.rel (0) target = $region17
    $region16: #{tpu_custom_call.1} parent=1 // pred_region
      %39 = dma.done [#allocation6], 16
    $region17: #{tpu_custom_call.1} parent=1 // pred_fallthru
      _
    %v40 = vld [vmem:[#allocation2] sm:$0x3]
    %v41 = vld [vmem:[#allocation5] sm:$0x1]
    %v43 = vperm.slane %v41, 0
    %v45 = vmul.f32 %v40, %v43
    %vm46 = vcmask 254976
    %47 = vst.msk [vmem:[#allocation7] sm:$0x3] %vm46, %v45
    // Predicated region
    $region18: #{tpu_custom_call.1} parent=1 // pred_check
      _
    $region19: #{tpu_custom_call.1} parent=1 // pred_check_branch
      %49 = sbr.rel (0) target = $region21
    $region20: #{tpu_custom_call.1} parent=1 // pred_region
      %51 = vsyncadd [#allocation4], 0
      %s53 = sshll.u32 [#allocation7], 4
      %s54 = int_to_ptr.vmem [resolvable:$true] %s53
      %s55 = sshll.u32 %s2, 4
      %s56 = int_to_ptr.hbm [resolvable:$true] %s55
      %58 = dma.vmem_to_hbm [thread:$0]  %s54, 32, %s56, [#allocation4]
    $region21: #{tpu_custom_call.1} parent=1 // pred_fallthru
      _
    // Predicated region
    $region22: #{tpu_custom_call.1} parent=1 // pred_check
      _
    $region23: #{tpu_custom_call.1} parent=1 // pred_check_branch
      %60 = sbr.rel (0) target = $region25
    $region24: #{tpu_custom_call.1} parent=1 // pred_region
      %62 = dma.done [#allocation4], 32
    $region25: #{tpu_custom_call.1} parent=1 // pred_fallthru
      _
    %63 = vsyncpa [#allocation3], 1
    %64 = vsyncpa [#allocation6], 1
    %65 = vsyncpa [#allocation4], 1

</llo_original>
